<compile_context>
chip_gen: v6e
topology: v6e:2x2x1
jax: 0.10.0
libtpu: 0.0.40
codegen_flags: <defaults>
</compile_context>

<pallas_src>
import jax
import jax.numpy as jnp
from jax.experimental import pallas as pl
from jax.experimental.pallas import tpu as pltpu

HIDDEN = 10  # fixed by SmallRho.__init__ (fc1 out_features)
_MIB = 1024 * 1024


def _round_up(n, m):
    return ((n + m - 1) // m) * m


def _cdiv(a, b):
    return -(-a // b)


# ----------------------------------------------------------------------------- kernels


def _small_rho_kernel(x_ref, w1_ref, b1_ref, w2_ref, b2_ref, o_ref):
    # fc1: (TB, D_in) @ (D_in, 10) on the MXU, f32 accumulation regardless of input dtype.
    h = jnp.dot(x_ref[...], w1_ref[...], preferred_element_type=jnp.float32)
    h = jnp.maximum(h + b1_ref[...].astype(jnp.float32), 0.0)
    # fc2: tiny K=10 matmul; upcast w2 so the epilogue math is all-f32 (v5e VPU has no bf16).
    y = jnp.dot(h, w2_ref[...].astype(jnp.float32), preferred_element_type=jnp.float32)
    y = y + b2_ref[...].astype(jnp.float32)
    o_ref[...] = y.astype(o_ref.dtype)


def _small_rho_kernel_out1(x_ref, w1_ref, b1_ref, w2_row_ref, b2_ref, o_ref):
    # fc1 on the MXU (f32 accumulation).
    h = jnp.dot(x_ref[...], w1_ref[...], preferred_element_type=jnp.float32)
    h = jnp.maximum(h + b1_ref[...].astype(jnp.float32), 0.0)
    # fc2 with out_features == 1: VPU multiply + XLU lane reduction instead of an N=1 MXU pass.
    y = jnp.sum(h * w2_row_ref[...].astype(jnp.float32), axis=-1, keepdims=True)
    o_ref[...] = (y + b2_ref[...].astype(jnp.float32)).astype(o_ref.dtype)


# ----------------------------------------------------------------------------- planning


def _vmem_plan(d_in, w_dtype):
    """Per-chip (x_stream_budget_bytes, vmem_limit_bytes)."""
    try:
        phys = int(pltpu.get_tpu_info().vmem_capacity_bytes)
    except Exception:
        phys = 64 * _MIB  # conservative fallback: v7x per-TensorCore VMEM
    # Budget for the double-buffered x stream.
    x_budget = 24 * _MIB if phys <= 64 * _MIB else 48 * _MIB
    # Resident weights: w1 is lane-padded to 128 columns in VMEM (x2 if double-buffered).
    w_resident = 2 * _round_up(d_in, 8) * 128 * jnp.dtype(w_dtype).itemsize
    vmem_limit = int(min(phys - 8 * _MIB, x_budget + w_resident + 16 * _MIB))
    return x_budget, vmem_limit


def _choose_tile_b(B, d_in, x_dtype, x_budget_bytes):
    """Pick a batch tile: sublane-aligned for the dtype, VMEM-budgeted, >= ~8 grid steps."""
    itemsize = jnp.dtype(x_dtype).itemsize
    sublane = max(8, 32 // itemsize)          # 8 rows f32, 16 bf16, 32 int8/fp8
    d_lanes = _round_up(d_in, 128)            # lane padding of an x tile in VMEM
    # Largest tile whose double-buffered x stream fits the budget.
    from_budget = max(sublane,
                      (x_budget_bytes // (2 * d_lanes * itemsize)) // sublane * sublane)
    target = 4096 if d_in < 256 else 2048     # amortize per-grid-step overhead
    tile_b = min(from_budget, target)
    # Keep >= ~8 grid steps when the batch allows (v7x: 2 TCs x >=4 pipelined steps each).
    min_steps = 8
    if B >= min_steps * sublane:
        tile_b = min(tile_b, _round_up(_cdiv(B, min_steps), sublane))
    # Never bigger than the sublane-padded batch.
    tile_b = max(sublane, min(tile_b, _round_up(B, sublane)))
    return tile_b, sublane


# ----------------------------------------------------------------------------- forward


def small_rho_forward(x, w1, b1, w2, b2, *, tile_b=None, allow_input_fusion=None):
    """x: (B, input_size); w1: (input_size, 10); b1: (1, 10);
       w2: (10, output_size); b2: (1, output_size).
       For bandwidth-bound deployments pass x / w1 / w2 in bf16; accumulation stays f32."""
    B, d_in = x.shape
    hidden, out_size = w2.shape
    assert w1.shape == (d_in, hidden) and hidden == HIDDEN, (w1.shape, w2.shape)

    x_budget, vmem_limit = _vmem_plan(d_in, w1.dtype)
    auto_tile, sublane = _choose_tile_b(B, d_in, x.dtype, x_budget)
    if tile_b is None:
        tile_b = auto_tile
    else:
        tile_b = max(sublane, _round_up(int(tile_b), sublane))
    grid = (pl.cdiv(B, tile_b),)  # ragged final block: Pallas masks OOB rows, no jnp.pad copy

    if out_size == 1:
        kernel = _small_rho_kernel_out1
        w2_arg = w2.reshape(1, hidden)  # (1, 10) row for the VPU broadcast + lane reduce
    else:
        kernel = _small_rho_kernel
        w2_arg = w2

    x_bytes = jnp.dtype(x.dtype).itemsize
    w_bytes = jnp.dtype(w1.dtype).itemsize
    cost = pl.CostEstimate(
        flops=2 * B * (d_in * hidden + hidden * out_size),
        transcendentals=0,
        bytes_accessed=(B * d_in * x_bytes
                        + B * out_size * x_bytes
                        + (d_in * hidden + hidden + hidden * out_size + out_size) * w_bytes),
    )

    x_spec = pl.BlockSpec((tile_b, d_in), lambda i: (i, 0))
    out_spec = pl.BlockSpec((tile_b, out_size), lambda i: (i, 0))

    def build(single_buffer_weights):
        # Constant block index -> weights/biases are DMA'd once and stay VMEM-resident.
        if single_buffer_weights:
            const = lambda shape: pl.BlockSpec(shape, lambda i: (0, 0),
                                               pipeline_mode=pl.Buffered(1))
        else:
            const = lambda shape: pl.BlockSpec(shape, lambda i: (0, 0))
        return pl.pallas_call(
            kernel,
            out_shape=jax.ShapeDtypeStruct((B, out_size), x.dtype),
            grid=grid,
            in_specs=[
                x_spec,
                const(w1.shape),
                const(b1.shape),
                const(w2_arg.shape),
                const(b2.shape),
            ],
            out_specs=out_spec,
            compiler_params=pltpu.CompilerParams(
                dimension_semantics=("parallel",),
                vmem_limit_bytes=vmem_limit,
                allow_input_fusion=allow_input_fusion,
            ),
            cost_estimate=cost,
        )

    try:
        # Preferred: single-buffer the grid-invariant weights/biases (frees VMEM headroom).
        return build(True)(x, w1, b1, w2_arg, b2)
    except Exception:
        # Fallback if this JAX build rejects pipeline_mode on a top-level pallas_call.
        return build(False)(x, w1, b1, w2_arg, b2)


# ----------------------------------------------------------------------------- test utils


def init_params(key, input_size, output_size=1, dtype=jnp.float32):
    """Deterministic synthetic init mirroring nn.Linear's uniform(-1/sqrt(fan_in), +)."""
    k1, k2, k3, k4 = jax.random.split(key, 4)
    bound1 = 1.0 / (input_size ** 0.5)
    bound2 = 1.0 / (HIDDEN ** 0.5)
    # stored pre-transposed: (in_features, out_features)
    w1 = jax.random.uniform(k1, (input_size, HIDDEN), dtype, -bound1, bound1)
    b1 = jax.random.uniform(k2, (1, HIDDEN), dtype, -bound1, bound1)
    w2 = jax.random.uniform(k3, (HIDDEN, output_size), dtype, -bound2, bound2)
    b2 = jax.random.uniform(k4, (1, output_size), dtype, -bound2, bound2)
    return w1, b1, w2, b2


def _reference(x, w1, b1, w2, b2):
    h = jnp.maximum(x @ w1 + b1, 0.0)
    return h @ w2 + b2


if __name__ == "__main__":
    key = jax.random.PRNGKey(0)
    kx1, kp1, kx2, kp2 = jax.random.split(key, 4)

    # Case 1: SmallRho default (output_size=1), small shape -> VPU/XLU fc2 path, grid=(1,).
    batch, input_size, output_size = 8, 32, 1
    x = jax.random.normal(kx1, (batch, input_size), jnp.float32)
    params = init_params(kp1, input_size, output_size)
    out = jax.block_until_ready(small_rho_forward(x, *params))
    ref = _reference(x, *params)
    assert out.shape == (batch, output_size), out.shape
    assert jnp.allclose(out, ref, atol=1e-5, rtol=1e-5), "mismatch vs reference (out_size=1)"

    # Case 2: ragged batch (300 rows, no pad copy), multi-step grid, general fc2 path, f32.
    batch2, output_size2 = 300, 4
    x2 = jax.random.normal(kx2, (batch2, input_size), jnp.float32)
    params2 = init_params(kp2, input_size, output_size2)
    out2 = jax.block_until_ready(small_rho_forward(x2, *params2))
    ref2 = _reference(x2, *params2)
    assert out2.shape == (batch2, output_size2), out2.shape
    assert jnp.allclose(out2, ref2, atol=1e-5, rtol=1e-5), "mismatch vs reference (out_size=4)"

    # Case 3: bf16 x/weights (halves the dominant HBM stream), f32 accumulation in-kernel,
    # 16-row sublane tiling, ragged final block. Compared against the f32 reference.
    xb = x2.astype(jnp.bfloat16)
    pb = tuple(p.astype(jnp.bfloat16) for p in params2)
    out3 = jax.block_until_ready(small_rho_forward(xb, *pb))
    assert out3.shape == (batch2, output_size2), out3.shape
    assert jnp.allclose(out3.astype(jnp.float32), ref2, atol=1e-1, rtol=5e-2), \
        "mismatch vs reference (bf16 inputs)"

    print("KERNEL_OK")
</pallas_src>

<mosaic_0001>
module attributes {stable_mosaic.version = 11 : i64} {
  func.func @_small_rho_kernel_out1(%arg0: i32, %arg1: memref<8x32xf32, #tpu.memory_space<vmem>>, %arg2: memref<32x10xf32, #tpu.memory_space<vmem>>, %arg3: memref<1x10xf32, #tpu.memory_space<vmem>>, %arg4: memref<1x10xf32, #tpu.memory_space<vmem>>, %arg5: memref<1x1xf32, #tpu.memory_space<vmem>>, %arg6: memref<8x1xf32, #tpu.memory_space<vmem>>) attributes {dimension_semantics = [#tpu.dimension_semantics<parallel>], iteration_bounds = array<i64: 1>, scalar_prefetch = 0 : i64, scratch_operands = 0 : i64, tpu.core_type = #tpu.core_type<tc>, window_params = [{transform_indices = @transform_0, window_bounds = array<i64: 8, 32>}, {pipeline_mode = #tpu.pipeline_mode<synchronous>, transform_indices = @transform_1, window_bounds = array<i64: 32, 10>}, {pipeline_mode = #tpu.pipeline_mode<synchronous>, transform_indices = @transform_2, window_bounds = array<i64: 1, 10>}, {pipeline_mode = #tpu.pipeline_mode<synchronous>, transform_indices = @transform_3, window_bounds = array<i64: 1, 10>}, {pipeline_mode = #tpu.pipeline_mode<synchronous>, transform_indices = @transform_4, window_bounds = array<i64: 1, 1>}, {transform_indices = @transform_5, window_bounds = array<i64: 8, 1>}]} {
    %c0 = arith.constant 0 : index
    %c0_0 = arith.constant 0 : index
    %0 = vector.load %arg1[%c0, %c0_0] : memref<8x32xf32, #tpu.memory_space<vmem>>, vector<8x32xf32>
    %c0_1 = arith.constant 0 : index
    %c0_2 = arith.constant 0 : index
    %1 = vector.load %arg2[%c0_1, %c0_2] : memref<32x10xf32, #tpu.memory_space<vmem>>, vector<32x10xf32>
    %cst = arith.constant dense<0.000000e+00> : vector<8x10xf32>
    %2 = tpu.matmul %0, %1, %cst {dimension_numbers = #tpu.dot_dimension_numbers<[1], [0], [0], [1], [0, 0, 1, 1], [], []>} : vector<8x32xf32>, vector<32x10xf32>, vector<8x10xf32> -> vector<8x10xf32>
    %c0_3 = arith.constant 0 : index
    %c0_4 = arith.constant 0 : index
    %3 = vector.load %arg3[%c0_3, %c0_4] : memref<1x10xf32, #tpu.memory_space<vmem>>, vector<1x10xf32>
    %4 = vector.broadcast %3 : vector<1x10xf32> to vector<8x10xf32>
    %5 = arith.addf %2, %4 : vector<8x10xf32>
    %cst_5 = arith.constant 0.000000e+00 : f32
    %6 = vector.broadcast %cst_5 : f32 to vector<8x10xf32>
    %7 = arith.maximumf %5, %6 : vector<8x10xf32>
    %c0_6 = arith.constant 0 : index
    %c0_7 = arith.constant 0 : index
    %8 = vector.load %arg4[%c0_6, %c0_7] : memref<1x10xf32, #tpu.memory_space<vmem>>, vector<1x10xf32>
    %9 = vector.broadcast %8 : vector<1x10xf32> to vector<8x10xf32>
    %10 = arith.mulf %7, %9 : vector<8x10xf32>
    %cst_8 = arith.constant dense<0.000000e+00> : vector<8xf32>
    %11 = vector.multi_reduction <add>, %10, %cst_8 [1] : vector<8x10xf32> to vector<8xf32>
    %12 = vector.shape_cast %11 : vector<8xf32> to vector<8x1xf32>
    %c0_9 = arith.constant 0 : index
    %c0_10 = arith.constant 0 : index
    %13 = vector.load %arg5[%c0_9, %c0_10] : memref<1x1xf32, #tpu.memory_space<vmem>>, vector<1x1xf32>
    %14 = vector.broadcast %13 : vector<1x1xf32> to vector<8x1xf32>
    %15 = arith.addf %12, %14 : vector<8x1xf32>
    %c0_11 = arith.constant 0 : index
    %c0_12 = arith.constant 0 : index
    %16 = vector.load %arg6[%c0_11, %c0_12] : memref<8x1xf32, #tpu.memory_space<vmem>>, vector<8x1xf32>
    tpu.vector_store %arg6[%c0_11, %c0_12], %15 {strides = array<i32>} : memref<8x1xf32, #tpu.memory_space<vmem>>, vector<8x1xf32>,
    return
  }
  func.func @transform_0(%arg0: i32) -> (i32, i32) {
    %c0_i32 = arith.constant 0 : i32
    %c0_i32_0 = arith.constant 0 : i32
    return %arg0, %c0_i32 : i32, i32
  }
  func.func @transform_1(%arg0: i32) -> (i32, i32) {
    %c0_i32 = arith.constant 0 : i32
    %c0_i32_0 = arith.constant 0 : i32
    %c0_i32_1 = arith.constant 0 : i32
    return %c0_i32, %c0_i32_0 : i32, i32
  }
  func.func @transform_2(%arg0: i32) -> (i32, i32) {
    %c0_i32 = arith.constant 0 : i32
    %c0_i32_0 = arith.constant 0 : i32
    %c0_i32_1 = arith.constant 0 : i32
    return %c0_i32, %c0_i32_0 : i32, i32
  }
  func.func @transform_3(%arg0: i32) -> (i32, i32) {
    %c0_i32 = arith.constant 0 : i32
    %c0_i32_0 = arith.constant 0 : i32
    %c0_i32_1 = arith.constant 0 : i32
    return %c0_i32, %c0_i32_0 : i32, i32
  }
  func.func @transform_4(%arg0: i32) -> (i32, i32) {
    %c0_i32 = arith.constant 0 : i32
    %c0_i32_0 = arith.constant 0 : i32
    %c0_i32_1 = arith.constant 0 : i32
    return %c0_i32, %c0_i32_0 : i32, i32
  }
  func.func @transform_5(%arg0: i32) -> (i32, i32) {
    %c0_i32 = arith.constant 0 : i32
    %c0_i32_0 = arith.constant 0 : i32
    return %arg0, %c0_i32 : i32, i32
  }
}

module attributes {stable_mosaic.version = 11 : i64} {
  func.func @_small_rho_kernel_out1(%arg0: i32, %arg1: memref<8x32xf32, #tpu.memory_space<vmem>>, %arg2: memref<32x10xf32, #tpu.memory_space<vmem>>, %arg3: memref<1x10xf32, #tpu.memory_space<vmem>>, %arg4: memref<1x10xf32, #tpu.memory_space<vmem>>, %arg5: memref<1x1xf32, #tpu.memory_space<vmem>>, %arg6: memref<8x1xf32, #tpu.memory_space<vmem>>) attributes {dimension_semantics = [#tpu.dimension_semantics<parallel>], iteration_bounds = array<i64: 1>, scalar_prefetch = 0 : i64, scratch_operands = 0 : i64, tpu.core_type = #tpu.core_type<tc>, window_params = [{transform_indices = @transform_0, window_bounds = array<i64: 8, 32>}, {pipeline_mode = #tpu.pipeline_mode<synchronous>, transform_indices = @transform_1, window_bounds = array<i64: 32, 10>}, {pipeline_mode = #tpu.pipeline_mode<synchronous>, transform_indices = @transform_2, window_bounds = array<i64: 1, 10>}, {pipeline_mode = #tpu.pipeline_mode<synchronous>, transform_indices = @transform_3, window_bounds = array<i64: 1, 10>}, {pipeline_mode = #tpu.pipeline_mode<synchronous>, transform_indices = @transform_4, window_bounds = array<i64: 1, 1>}, {transform_indices = @transform_5, window_bounds = array<i64: 8, 1>}]} {
    %c0 = arith.constant 0 : index
    %c0_0 = arith.constant 0 : index
    %0 = vector.load %arg1[%c0, %c0_0] : memref<8x32xf32, #tpu.memory_space<vmem>>, vector<8x32xf32>
    %c0_1 = arith.constant 0 : index
    %c0_2 = arith.constant 0 : index
    %1 = vector.load %arg2[%c0_1, %c0_2] : memref<32x10xf32, #tpu.memory_space<vmem>>, vector<32x10xf32>
    %cst = arith.constant dense<0.000000e+00> : vector<8x10xf32>
    %2 = tpu.matmul %0, %1, %cst {dimension_numbers = #tpu.dot_dimension_numbers<[1], [0], [0], [1], [0, 0, 1, 1], [], []>} : vector<8x32xf32>, vector<32x10xf32>, vector<8x10xf32> -> vector<8x10xf32>
    %c0_3 = arith.constant 0 : index
    %c0_4 = arith.constant 0 : index
    %3 = vector.load %arg3[%c0_3, %c0_4] : memref<1x10xf32, #tpu.memory_space<vmem>>, vector<1x10xf32>
    %4 = vector.broadcast %3 : vector<1x10xf32> to vector<8x10xf32>
    %5 = arith.addf %2, %4 : vector<8x10xf32>
    %cst_5 = arith.constant 0.000000e+00 : f32
    %6 = vector.broadcast %cst_5 : f32 to vector<8x10xf32>
    %7 = arith.maximumf %5, %6 : vector<8x10xf32>
    %c0_6 = arith.constant 0 : index
    %c0_7 = arith.constant 0 : index
    %8 = vector.load %arg4[%c0_6, %c0_7] : memref<1x10xf32, #tpu.memory_space<vmem>>, vector<1x10xf32>
    %9 = vector.broadcast %8 : vector<1x10xf32> to vector<8x10xf32>
    %10 = arith.mulf %7, %9 : vector<8x10xf32>
    %cst_8 = arith.constant dense<0.000000e+00> : vector<8xf32>
    %11 = vector.multi_reduction <add>, %10, %cst_8 [1] : vector<8x10xf32> to vector<8xf32>
    %12 = vector.shape_cast %11 : vector<8xf32> to vector<8x1xf32>
    %c0_9 = arith.constant 0 : index
    %c0_10 = arith.constant 0 : index
    %13 = vector.load %arg5[%c0_9, %c0_10] : memref<1x1xf32, #tpu.memory_space<vmem>>, vector<1x1xf32>
    %14 = vector.broadcast %13 : vector<1x1xf32> to vector<8x1xf32>
    %15 = arith.addf %12, %14 : vector<8x1xf32>
    %c0_11 = arith.constant 0 : index
    %c0_12 = arith.constant 0 : index
    %16 = vector.load %arg6[%c0_11, %c0_12] : memref<8x1xf32, #tpu.memory_space<vmem>>, vector<8x1xf32>
    tpu.vector_store %arg6[%c0_11, %c0_12], %15 {strides = array<i32>} : memref<8x1xf32, #tpu.memory_space<vmem>>, vector<8x1xf32>,
    return
  }
  func.func @transform_0(%arg0: i32) -> (i32, i32) {
    %c0_i32 = arith.constant 0 : i32
    %c0_i32_0 = arith.constant 0 : i32
    return %arg0, %c0_i32 : i32, i32
  }
  func.func @transform_1(%arg0: i32) -> (i32, i32) {
    %c0_i32 = arith.constant 0 : i32
    %c0_i32_0 = arith.constant 0 : i32
    %c0_i32_1 = arith.constant 0 : i32
    return %c0_i32, %c0_i32_0 : i32, i32
  }
  func.func @transform_2(%arg0: i32) -> (i32, i32) {
    %c0_i32 = arith.constant 0 : i32
    %c0_i32_0 = arith.constant 0 : i32
    %c0_i32_1 = arith.constant 0 : i32
    return %c0_i32, %c0_i32_0 : i32, i32
  }
  func.func @transform_3(%arg0: i32) -> (i32, i32) {
    %c0_i32 = arith.constant 0 : i32
    %c0_i32_0 = arith.constant 0 : i32
    %c0_i32_1 = arith.constant 0 : i32
    return %c0_i32, %c0_i32_0 : i32, i32
  }
  func.func @transform_4(%arg0: i32) -> (i32, i32) {
    %c0_i32 = arith.constant 0 : i32
    %c0_i32_0 = arith.constant 0 : i32
    %c0_i32_1 = arith.constant 0 : i32
    return %c0_i32, %c0_i32_0 : i32, i32
  }
  func.func @transform_5(%arg0: i32) -> (i32, i32) {
    %c0_i32 = arith.constant 0 : i32
    %c0_i32_0 = arith.constant 0 : i32
    return %arg0, %c0_i32 : i32, i32
  }
}

</mosaic_0001>

<llo_original>
// kernel: tpu_custom_call.1
$region0: #{tpu_custom_call.1}
  #allocation0 [shape = 'u32[]', space=smem, size = 0x4, offset = 0x4, fixed_abs, tag = 'smem constant byte address 0x4 - core index']
  #allocation1 [shape = 'u32[144,128]{1,0:T(1,128)}', space=vmem, size = 0x12000, scoped, tag = 'internal scratch']
  #allocation2 [shape = 'f32[1,1]{1,0:T(1,128)S(1)}', space=vmem, size = 0x200, scoped, tag = 'scoped memory for tpu_custom_call.1']
  %s0 = inlined_call_operand.vmem [shape: f32[8,32], index: 0, kind: input, shape index: {}]
  %s1 = inlined_call_operand.vmem [shape: f32[32,10], index: 1, kind: input, shape index: {}]
  %s2 = inlined_call_operand.vmem [shape: f32[1,10], index: 2, kind: input, shape index: {}]
  %s3 = inlined_call_operand.vmem [shape: f32[1,10], index: 3, kind: input, shape index: {}]
  %s4 = inlined_call_operand.<no memory space> [shape: f32[1,1], index: 4, kind: input, shape index: {}]
  %s5 = inlined_call_operand.vmem [shape: f32[8,1], index: 5, kind: output, shape index: {}]
  %s6 = sld [smem:[#allocation0]]
  $region30: #{tpu_custom_call.1} parent=0
    _
  %s8 = ssub.s32 1, %s6
  %s9 = scalar_select 0, %s8, %s6
  %v10 = vstv %s4
  %11 = vst [vmem:[#allocation2] sm:$0x1] %v10
  // Predicated region
  $region2: #{tpu_custom_call.1} parent=0 // pred_check
    _
  $region3: #{tpu_custom_call.1} parent=0 // pred_check_branch
    %13 = sbr.rel (0) target = $region5
  $region4: #{tpu_custom_call.1} parent=0 // pred_region
    _
  $region5: #{tpu_custom_call.1} parent=0 // pred_fallthru
    _
  // Predicated region
  $region6: #{tpu_custom_call.1} parent=0 // pred_check
    _
  $region7: #{tpu_custom_call.1} parent=0 // pred_check_branch
    %15 = sbr.rel (0) target = $region9
  $region8: #{tpu_custom_call.1} parent=0 // pred_region
    _
  $region9: #{tpu_custom_call.1} parent=0 // pred_fallthru
    _
  // Predicated region
  $region10: #{tpu_custom_call.1} parent=0 // pred_check
    _
  $region11: #{tpu_custom_call.1} parent=0 // pred_check_branch
    %17 = sbr.rel (0) target = $region13
  $region12: #{tpu_custom_call.1} parent=0 // pred_region
    _
  $region13: #{tpu_custom_call.1} parent=0 // pred_fallthru
    _
  // Predicated region
  $region14: #{tpu_custom_call.1} parent=0 // pred_check
    _
  $region15: #{tpu_custom_call.1} parent=0 // pred_check_branch
    %19 = sbr.rel (0) target = $region17
  $region16: #{tpu_custom_call.1} parent=0 // pred_region
    _
  $region17: #{tpu_custom_call.1} parent=0 // pred_fallthru
    _
  // Predicated region
  $region18: #{tpu_custom_call.1} parent=0 // pred_check
    _
  $region19: #{tpu_custom_call.1} parent=0 // pred_check_branch
    %21 = sbr.rel (0) target = $region21
  $region20: #{tpu_custom_call.1} parent=0 // pred_region
    _
  $region21: #{tpu_custom_call.1} parent=0 // pred_fallthru
    _
  %v22 = vld [vmem:[%s0] sm:$0xff]
  %v23 = vld [vmem:[%s1] sm:$0xff]
  %v24 = vld [vmem:[%s1 + $0x8] sm:$0xff]
  %v25 = vld [vmem:[%s1 + $0x10] sm:$0xff]
  %v26 = vld [vmem:[%s1 + $0x18] sm:$0xff]
  %v27 = vld [vmem:[%s2] sm:$0x1]
  %v29 = vlaneseq
  %v30 = vshrl.u32 %v29, 7
  %v31 = vsub.s32 0, %v30
  %v32 = vrot.slane %v27, %v31
  %vm34 = vcmask 261120
  %v36 = vsel %vm34, %v22, 0
  %38 = vmatprep.subr.mxu0 0.0
  %39 = vmatpush1.msra.mxu0 0.0
  %40 = vmatprep.subr.mxu0 0.0
  %41 = vmatpush1.msra.mxu0 0.0
  %42 = vmatprep.subr.mxu0 0.0
  %43 = vmatpush1.msra.mxu0 0.0
  %44 = vmatprep.subr.mxu0 0.0
  %45 = vmatpush1.msra.mxu0 0.0
  %46 = vmatprep.subr.mxu0 0.0
  %47 = vmatpush1.msra.mxu0 0.0
  %48 = vmatprep.subr.mxu0 0.0
  %49 = vmatpush1.msra.mxu0 0.0
  %50 = vmatprep.subr.mxu0 0.0
  %51 = vmatpush1.msra.mxu0 0.0
  %52 = vmatprep.subr.mxu0 0.0
  %53 = vmatpush1.msra.mxu0 0.0
  %54 = vmatprep.subr.mxu0 0.0
  %55 = vmatpush1.msra.mxu0 0.0
  %56 = vmatprep.subr.mxu0 0.0
  %57 = vmatpush1.msra.mxu0 0.0
  %58 = vmatprep.subr.mxu0 0.0
  %59 = vmatpush1.msra.mxu0 0.0
  %60 = vmatprep.subr.mxu0 0.0
  %61 = vmatpush1.msra.mxu0 0.0
  %62 = vmatprep.subr.mxu0 0.0
  %63 = vmatpush1.msra.mxu0 %v26
  %64 = vmatprep.subr.mxu0 0.0
  %65 = vmatpush1.msra.mxu0 %v25
  %66 = vmatprep.subr.mxu0 0.0
  %67 = vmatpush1.msra.mxu0 %v24
  %68 = vmatprep.subr.mxu0 0.0
  %69 = vmatpush1.msra.mxu0 %v23
  %70 = vmatprep.subr.mxu0 0.0
  %71 = vmatpush2.msra.mxu0 0.0
  %72 = vmatprep.subr.mxu0 0.0
  %73 = vmatpush2.msra.mxu0 0.0
  %74 = vmatprep.subr.mxu0 0.0
  %75 = vmatpush2.msra.mxu0 0.0
  %76 = vmatprep.subr.mxu0 0.0
  %77 = vmatpush2.msra.mxu0 0.0
  %78 = vmatprep.subr.mxu0 0.0
  %79 = vmatpush2.msra.mxu0 0.0
  %80 = vmatprep.subr.mxu0 0.0
  %81 = vmatpush2.msra.mxu0 0.0
  %82 = vmatprep.subr.mxu0 0.0
  %83 = vmatpush2.msra.mxu0 0.0
  %84 = vmatprep.subr.mxu0 0.0
  %85 = vmatpush2.msra.mxu0 0.0
  %86 = vmatprep.subr.mxu0 0.0
  %87 = vmatpush2.msra.mxu0 0.0
  %88 = vmatprep.subr.mxu0 0.0
  %89 = vmatpush2.msra.mxu0 0.0
  %90 = vmatprep.subr.mxu0 0.0
  %91 = vmatpush2.msra.mxu0 0.0
  %92 = vmatprep.subr.mxu0 0.0
  %93 = vmatpush2.msra.mxu0 0.0
  %94 = vmatprep.subr.mxu0 0.0
  %95 = vmatpush2.msra.mxu0 0.0
  %96 = vmatprep.subr.mxu0 0.0
  %97 = vmatpush2.msra.mxu0 0.0
  %98 = vmatprep.subr.mxu0 0.0
  %99 = vmatpush2.msra.mxu0 0.0
  %100 = vmatprep.subr.mxu0 0.0
  %101 = vmatpush2.msra.mxu0 0.0
  %102 = vmatprep.mubr.f32.mxu0 0.0
  %103 = vmatmul.mubr.f32.gmra.mxu0 %v36
  %v104 = vpop.f32.mrf.mxu0
  %v105 = vadd.f32 %v32, %v104
  %v106 = vpop.f32.mrf.mxu0
  %107 = vdwg.mxu0
  %v108 = vmax.f32 %v105, 0.0
  %v109 = vld [vmem:[%s3] sm:$0x1]
  %v111 = vlaneseq
  %v112 = vshrl.u32 %v111, 7
  %v113 = vsub.s32 0, %v112
  %v114 = vrot.slane %v109, %v113
  %v116 = vmul.f32 %v108, %v114
  %vm117 = vcmask 80896
  %v118 = vsel %vm117, %v116, 0.0
  %119 = vadd.xlane.f32.xlu0 %v118
  %v120 = vpop.xlane.xlu0 %119
  %v121 = vld [vmem:[#allocation2] sm:$0x1]
  %v123 = vlaneseq
  %v124 = vshrl.u32 %v123, 7
  %v125 = vsub.s32 0, %v124
  %v126 = vrot.slane %v121, %v125
  %v128 = vadd.f32 %v120, %v126
  %vm129 = vcmask 7168
  %130 = vst.msk [vmem:[%s5] sm:$0xff] %vm129, %v128
  // Predicated region
  $region22: #{tpu_custom_call.1} parent=0 // pred_check
    _
  $region23: #{tpu_custom_call.1} parent=0 // pred_check_branch
    %132 = sbr.rel (0) target = $region25
  $region24: #{tpu_custom_call.1} parent=0 // pred_region
    _
  $region25: #{tpu_custom_call.1} parent=0 // pred_fallthru
    _
  // Predicated region
  $region26: #{tpu_custom_call.1} parent=0 // pred_check
    _
  $region27: #{tpu_custom_call.1} parent=0 // pred_check_branch
    %134 = sbr.rel (0) target = $region29
  $region28: #{tpu_custom_call.1} parent=0 // pred_region
    _
  $region29: #{tpu_custom_call.1} parent=0 // pred_fallthru
    _

// kernel: tpu_custom_call.1
$region0: #{tpu_custom_call.1}
  #allocation0 [shape = 'u32[]', space=smem, size = 0x4, offset = 0x4, fixed_abs, tag = 'smem constant byte address 0x4 - core index']
  #allocation1 [shape = 'u32[144,128]{1,0:T(1,128)}', space=vmem, size = 0x12000, scoped, tag = 'internal scratch']
  #allocation2 [shape = 'f32[1,1]{1,0:T(1,128)S(1)}', space=vmem, size = 0x200, scoped, tag = 'scoped memory for tpu_custom_call.1']
  %s0 = inlined_call_operand.vmem [shape: f32[8,32], index: 0, kind: input, shape index: {}]
  %s1 = inlined_call_operand.vmem [shape: f32[32,10], index: 1, kind: input, shape index: {}]
  %s2 = inlined_call_operand.vmem [shape: f32[1,10], index: 2, kind: input, shape index: {}]
  %s3 = inlined_call_operand.vmem [shape: f32[1,10], index: 3, kind: input, shape index: {}]
  %s4 = inlined_call_operand.<no memory space> [shape: f32[1,1], index: 4, kind: input, shape index: {}]
  %s5 = inlined_call_operand.vmem [shape: f32[8,1], index: 5, kind: output, shape index: {}]
  %s6 = sld [smem:[#allocation0]]
  $region30: #{tpu_custom_call.1} parent=0
    _
  %s8 = ssub.s32 1, %s6
  %s9 = scalar_select 0, %s8, %s6
  %v10 = vstv %s4
  %11 = vst [vmem:[#allocation2] sm:$0x1] %v10
  // Predicated region
  $region2: #{tpu_custom_call.1} parent=0 // pred_check
    _
  $region3: #{tpu_custom_call.1} parent=0 // pred_check_branch
    %13 = sbr.rel (0) target = $region5
  $region4: #{tpu_custom_call.1} parent=0 // pred_region
    _
  $region5: #{tpu_custom_call.1} parent=0 // pred_fallthru
    _
  // Predicated region
  $region6: #{tpu_custom_call.1} parent=0 // pred_check
    _
  $region7: #{tpu_custom_call.1} parent=0 // pred_check_branch
    %15 = sbr.rel (0) target = $region9
  $region8: #{tpu_custom_call.1} parent=0 // pred_region
    _
  $region9: #{tpu_custom_call.1} parent=0 // pred_fallthru
    _
  // Predicated region
  $region10: #{tpu_custom_call.1} parent=0 // pred_check
    _
  $region11: #{tpu_custom_call.1} parent=0 // pred_check_branch
    %17 = sbr.rel (0) target = $region13
  $region12: #{tpu_custom_call.1} parent=0 // pred_region
    _
  $region13: #{tpu_custom_call.1} parent=0 // pred_fallthru
    _
  // Predicated region
  $region14: #{tpu_custom_call.1} parent=0 // pred_check
    _
  $region15: #{tpu_custom_call.1} parent=0 // pred_check_branch
    %19 = sbr.rel (0) target = $region17
  $region16: #{tpu_custom_call.1} parent=0 // pred_region
    _
  $region17: #{tpu_custom_call.1} parent=0 // pred_fallthru
    _
  // Predicated region
  $region18: #{tpu_custom_call.1} parent=0 // pred_check
    _
  $region19: #{tpu_custom_call.1} parent=0 // pred_check_branch
    %21 = sbr.rel (0) target = $region21
  $region20: #{tpu_custom_call.1} parent=0 // pred_region
    _
  $region21: #{tpu_custom_call.1} parent=0 // pred_fallthru
    _
  %v22 = vld [vmem:[%s0] sm:$0xff]
  %v23 = vld [vmem:[%s1] sm:$0xff]
  %v24 = vld [vmem:[%s1 + $0x8] sm:$0xff]
  %v25 = vld [vmem:[%s1 + $0x10] sm:$0xff]
  %v26 = vld [vmem:[%s1 + $0x18] sm:$0xff]
  %v27 = vld [vmem:[%s2] sm:$0x1]
  %v29 = vlaneseq
  %v30 = vshrl.u32 %v29, 7
  %v31 = vsub.s32 0, %v30
  %v32 = vrot.slane %v27, %v31
  %vm34 = vcmask 261120
  %v36 = vsel %vm34, %v22, 0
  %38 = vmatprep.subr.mxu0 0.0
  %39 = vmatpush1.msra.mxu0 0.0
  %40 = vmatprep.subr.mxu0 0.0
  %41 = vmatpush1.msra.mxu0 0.0
  %42 = vmatprep.subr.mxu0 0.0
  %43 = vmatpush1.msra.mxu0 0.0
  %44 = vmatprep.subr.mxu0 0.0
  %45 = vmatpush1.msra.mxu0 0.0
  %46 = vmatprep.subr.mxu0 0.0
  %47 = vmatpush1.msra.mxu0 0.0
  %48 = vmatprep.subr.mxu0 0.0
  %49 = vmatpush1.msra.mxu0 0.0
  %50 = vmatprep.subr.mxu0 0.0
  %51 = vmatpush1.msra.mxu0 0.0
  %52 = vmatprep.subr.mxu0 0.0
  %53 = vmatpush1.msra.mxu0 0.0
  %54 = vmatprep.subr.mxu0 0.0
  %55 = vmatpush1.msra.mxu0 0.0
  %56 = vmatprep.subr.mxu0 0.0
  %57 = vmatpush1.msra.mxu0 0.0
  %58 = vmatprep.subr.mxu0 0.0
  %59 = vmatpush1.msra.mxu0 0.0
  %60 = vmatprep.subr.mxu0 0.0
  %61 = vmatpush1.msra.mxu0 0.0
  %62 = vmatprep.subr.mxu0 0.0
  %63 = vmatpush1.msra.mxu0 %v26
  %64 = vmatprep.subr.mxu0 0.0
  %65 = vmatpush1.msra.mxu0 %v25
  %66 = vmatprep.subr.mxu0 0.0
  %67 = vmatpush1.msra.mxu0 %v24
  %68 = vmatprep.subr.mxu0 0.0
  %69 = vmatpush1.msra.mxu0 %v23
  %70 = vmatprep.subr.mxu0 0.0
  %71 = vmatpush2.msra.mxu0 0.0
  %72 = vmatprep.subr.mxu0 0.0
  %73 = vmatpush2.msra.mxu0 0.0
  %74 = vmatprep.subr.mxu0 0.0
  %75 = vmatpush2.msra.mxu0 0.0
  %76 = vmatprep.subr.mxu0 0.0
  %77 = vmatpush2.msra.mxu0 0.0
  %78 = vmatprep.subr.mxu0 0.0
  %79 = vmatpush2.msra.mxu0 0.0
  %80 = vmatprep.subr.mxu0 0.0
  %81 = vmatpush2.msra.mxu0 0.0
  %82 = vmatprep.subr.mxu0 0.0
  %83 = vmatpush2.msra.mxu0 0.0
  %84 = vmatprep.subr.mxu0 0.0
  %85 = vmatpush2.msra.mxu0 0.0
  %86 = vmatprep.subr.mxu0 0.0
  %87 = vmatpush2.msra.mxu0 0.0
  %88 = vmatprep.subr.mxu0 0.0
  %89 = vmatpush2.msra.mxu0 0.0
  %90 = vmatprep.subr.mxu0 0.0
  %91 = vmatpush2.msra.mxu0 0.0
  %92 = vmatprep.subr.mxu0 0.0
  %93 = vmatpush2.msra.mxu0 0.0
  %94 = vmatprep.subr.mxu0 0.0
  %95 = vmatpush2.msra.mxu0 0.0
  %96 = vmatprep.subr.mxu0 0.0
  %97 = vmatpush2.msra.mxu0 0.0
  %98 = vmatprep.subr.mxu0 0.0
  %99 = vmatpush2.msra.mxu0 0.0
  %100 = vmatprep.subr.mxu0 0.0
  %101 = vmatpush2.msra.mxu0 0.0
  %102 = vmatprep.mubr.f32.mxu0 0.0
  %103 = vmatmul.mubr.f32.gmra.mxu0 %v36
  %v104 = vpop.f32.mrf.mxu0
  %v105 = vadd.f32 %v32, %v104
  %v106 = vpop.f32.mrf.mxu0
  %107 = vdwg.mxu0
  %v108 = vmax.f32 %v105, 0.0
  %v109 = vld [vmem:[%s3] sm:$0x1]
  %v111 = vlaneseq
  %v112 = vshrl.u32 %v111, 7
  %v113 = vsub.s32 0, %v112
  %v114 = vrot.slane %v109, %v113
  %v116 = vmul.f32 %v108, %v114
  %vm117 = vcmask 80896
  %v118 = vsel %vm117, %v116, 0.0
  %119 = vadd.xlane.f32.xlu0 %v118
  %v120 = vpop.xlane.xlu0 %119
  %v121 = vld [vmem:[#allocation2] sm:$0x1]
  %v123 = vlaneseq
  %v124 = vshrl.u32 %v123, 7
  %v125 = vsub.s32 0, %v124
  %v126 = vrot.slane %v121, %v125
  %v128 = vadd.f32 %v120, %v126
  %vm129 = vcmask 7168
  %130 = vst.msk [vmem:[%s5] sm:$0xff] %vm129, %v128
  // Predicated region
  $region22: #{tpu_custom_call.1} parent=0 // pred_check
    _
  $region23: #{tpu_custom_call.1} parent=0 // pred_check_branch
    %132 = sbr.rel (0) target = $region25
  $region24: #{tpu_custom_call.1} parent=0 // pred_region
    _
  $region25: #{tpu_custom_call.1} parent=0 // pred_fallthru
    _
  // Predicated region
  $region26: #{tpu_custom_call.1} parent=0 // pred_check
    _
  $region27: #{tpu_custom_call.1} parent=0 // pred_check_branch
    %134 = sbr.rel (0) target = $region29
  $region28: #{tpu_custom_call.1} parent=0 // pred_region
    _
  $region29: #{tpu_custom_call.1} parent=0 // pred_fallthru
    _

</llo_original>
